<compile_context>
chip_gen: v7x
topology: tpu7x:2x2x1
jax: 0.10.0
libtpu: 0.0.40
codegen_flags: <defaults>
</compile_context>

<pallas_src>
import functools

import jax
import jax.numpy as jnp
import numpy as np
from jax import lax
from jax.experimental import pallas as pl
from jax.experimental.pallas import tpu as pltpu

BN_EPS = 1e-5
CD_EPS = 1e-7
CD_TEMP = 2.0 / 3.0

FUSED_MAX_M = 512  # single-tile fused path when M_pad <= this


def _round_up(x, m):
    return ((x + m - 1) // m) * m


# ---------------------------------------------------------------------------
# Fused single-tile kernel: conv-as-matmul + dropout gate + BatchNorm (training
# batch-stats, biased variance) + affine + PReLU.  Used when the whole
# (C_out, M_pad) slab fits in one VMEM tile -> no HBM round trip of pre-BN y.
# ---------------------------------------------------------------------------
def _fused_conv_bn_prelu_kernel(w_ref, p_ref, s_ref, affine_ref, slope_ref,
                                o_ref, *, inv_count):
    # (C_out, K_pad) @ (K_pad, M_pad) -> (C_out, M_pad); bf16 in, f32 accumulate.
    y = jnp.dot(w_ref[...], p_ref[...], preferred_element_type=jnp.float32)
    y = y * s_ref[...]                     # per-column concrete-dropout gate (f32)
    # padded columns are exact zeros (zero patches, zero gate) -> stats exact
    # when dividing by the true element count.
    ssum = jnp.sum(y, axis=1, keepdims=True)
    ssq = jnp.sum(y * y, axis=1, keepdims=True)
    mean = ssum * inv_count
    var = ssq * inv_count - mean * mean
    inv_std = lax.rsqrt(var + BN_EPS)
    affine = affine_ref[...]               # (C_out, 2)
    gamma = affine[:, 0:1]
    beta = affine[:, 1:2]
    yhat = (y - mean) * (inv_std * gamma) + beta
    a = slope_ref[0]                       # PReLU slope (SMEM scalar)
    o_ref[...] = jnp.where(yhat > 0, yhat, a * yhat)


# ---------------------------------------------------------------------------
# Pass 1 (tiled path): conv-as-matmul (lane-dense) + fused dropout gate +
# per-channel BN sum/sumsq stats accumulated across M tiles.
# ---------------------------------------------------------------------------
def _conv_gate_stats_kernel(w_ref, p_ref, s_ref, y_ref, ssum_ref, ssq_ref):
    @pl.when(pl.program_id(0) == 0)
    def _init():
        ssum_ref[...] = jnp.zeros_like(ssum_ref)
        ssq_ref[...] = jnp.zeros_like(ssq_ref)

    y = jnp.dot(w_ref[...], p_ref[...], preferred_element_type=jnp.float32)
    y = y * s_ref[...]
    y_ref[...] = y
    ssum_ref[...] += jnp.sum(y, axis=1, keepdims=True)
    ssq_ref[...] += jnp.sum(y * y, axis=1, keepdims=True)


# ---------------------------------------------------------------------------
# Pass 2 (tiled path): BatchNorm (training batch-stats, biased variance) +
# affine + PReLU, applied tile-by-tile with the global stats from pass 1.
# ---------------------------------------------------------------------------
def _bn_prelu_kernel(y_ref, ssum_ref, ssq_ref, affine_ref, slope_ref, o_ref, *,
                     inv_count):
    mean = ssum_ref[...] * inv_count                       # (C_out, 1)
    var = ssq_ref[...] * inv_count - mean * mean           # biased variance
    inv_std = lax.rsqrt(var + BN_EPS)
    affine = affine_ref[...]                               # (C_out, 2)
    gamma = affine[:, 0:1]
    beta = affine[:, 1:2]
    yhat = (y_ref[...] - mean) * (inv_std * gamma) + beta
    a = slope_ref[0]
    o_ref[...] = jnp.where(yhat > 0, yhat, a * yhat)


# ---------------------------------------------------------------------------
# im2col directly in the (K, M) layout the kernel consumes.
# rows = (c, kd, kh, kw) matching conv_w.reshape(C_out, -1); cols = (n, od, oh, ow)
# ---------------------------------------------------------------------------
def _im2col_kxm(x, kd, kh, kw):
    N, C, D, H, W = x.shape
    od, oh, ow = D - kd + 1, H - kh + 1, W - kw + 1
    xt = jnp.transpose(x, (1, 0, 2, 3, 4))                 # (C, N, D, H, W) - small
    cols = [xt[:, :, i:i + od, j:j + oh, k:k + ow]
            for i in range(kd) for j in range(kh) for k in range(kw)]
    p = jnp.stack(cols, axis=1)                            # (C, kdhw, N, od, oh, ow)
    return p.reshape(C * kd * kh * kw, N * od * oh * ow), (od, oh, ow)


def conv3d_block_gated(x, gate_n, conv_w, bn_gamma, bn_beta, prelu_a):
    """PReLU(BN(Conv3d(gate_n[n] * x[n]))) with training-mode BatchNorm3d.

    The conv bias is intentionally omitted here: training-mode BN's mean
    subtraction cancels it exactly (it still enters the regularizer upstream).
    """
    N, C_in, D, H, W = x.shape
    C_out, _, KD, KH, KW = conv_w.shape

    patches, (od, oh, ow) = _im2col_kxm(x, KD, KH, KW)
    Kdim, M = patches.shape

    K_pad = _round_up(Kdim, 128)                           # 500 -> 512
    TM = min(FUSED_MAX_M, _round_up(M, 128))
    M_pad = _round_up(M, TM)
    n_tiles = M_pad // TM

    # bf16 MXU operands (f32 accumulation in-kernel); zero padding keeps the
    # statistics exact (padded columns produce exact zeros, divisor is true M).
    patches_p = jnp.pad(patches.astype(jnp.bfloat16),
                        ((0, K_pad - Kdim), (0, M_pad - M)))
    w_flat = conv_w.reshape(C_out, C_in * KD * KH * KW)    # contiguous, no transpose
    w_p = jnp.pad(w_flat.astype(jnp.bfloat16), ((0, 0), (0, K_pad - Kdim)))

    # per output column (= per output voxel, constant within a sample) gate
    col_scale = jnp.repeat(gate_n.astype(jnp.float32), od * oh * ow)
    col_scale = jnp.pad(col_scale, (0, M_pad - M)).reshape(1, M_pad)

    affine = jnp.stack([bn_gamma.astype(jnp.float32),
                        bn_beta.astype(jnp.float32)], axis=1)       # (C_out, 2)
    slope = jnp.reshape(prelu_a, (1,)).astype(jnp.float32)
    inv_count = 1.0 / float(M)

    if n_tiles == 1:
        # ---- fused path: single kernel, no HBM round trip of pre-BN y ----
        out_t = pl.pallas_call(
            functools.partial(_fused_conv_bn_prelu_kernel, inv_count=inv_count),
            out_shape=jax.ShapeDtypeStruct((C_out, M_pad), jnp.float32),
            grid_spec=pl.GridSpec(
                grid=(1,),
                in_specs=[
                    pl.BlockSpec((C_out, K_pad), lambda i: (0, 0)),
                    pl.BlockSpec((K_pad, M_pad), lambda i: (0, 0)),
                    pl.BlockSpec((1, M_pad), lambda i: (0, 0)),
                    pl.BlockSpec((C_out, 2), lambda i: (0, 0)),
                    pl.BlockSpec(memory_space=pltpu.MemorySpace.SMEM),
                ],
                out_specs=pl.BlockSpec((C_out, M_pad), lambda i: (0, 0)),
            ),
            compiler_params=pltpu.CompilerParams(
                dimension_semantics=("arbitrary",)),
        )(w_p, patches_p, col_scale, affine, slope)
    else:
        # ---- pass 1: conv + gate + per-channel sum/sumsq across M tiles ----
        y, ssum, ssq = pl.pallas_call(
            _conv_gate_stats_kernel,
            out_shape=(
                jax.ShapeDtypeStruct((C_out, M_pad), jnp.float32),
                jax.ShapeDtypeStruct((C_out, 1), jnp.float32),
                jax.ShapeDtypeStruct((C_out, 1), jnp.float32),
            ),
            grid_spec=pl.GridSpec(
                grid=(n_tiles,),
                in_specs=[
                    pl.BlockSpec((C_out, K_pad), lambda i: (0, 0)),  # weights (resident)
                    pl.BlockSpec((K_pad, TM), lambda i: (0, i)),     # patch tile
                    pl.BlockSpec((1, TM), lambda i: (0, i)),         # gate tile
                ],
                out_specs=(
                    pl.BlockSpec((C_out, TM), lambda i: (0, i)),     # pre-BN activations
                    pl.BlockSpec((C_out, 1), lambda i: (0, 0)),      # running sum   (resident)
                    pl.BlockSpec((C_out, 1), lambda i: (0, 0)),      # running sumsq (resident)
                ),
            ),
            compiler_params=pltpu.CompilerParams(
                dimension_semantics=("arbitrary",)),
        )(w_p, patches_p, col_scale)

        # ---- pass 2: normalize with global stats + affine + PReLU ----
        out_t = pl.pallas_call(
            functools.partial(_bn_prelu_kernel, inv_count=inv_count),
            out_shape=jax.ShapeDtypeStruct((C_out, M_pad), jnp.float32),
            grid_spec=pl.GridSpec(
                grid=(n_tiles,),
                in_specs=[
                    pl.BlockSpec((C_out, TM), lambda i: (0, i)),
                    pl.BlockSpec((C_out, 1), lambda i: (0, 0)),
                    pl.BlockSpec((C_out, 1), lambda i: (0, 0)),
                    pl.BlockSpec((C_out, 2), lambda i: (0, 0)),
                    pl.BlockSpec(memory_space=pltpu.MemorySpace.SMEM),  # PReLU slope
                ],
                out_specs=pl.BlockSpec((C_out, TM), lambda i: (0, i)),
            ),
            compiler_params=pltpu.CompilerParams(
                dimension_semantics=("parallel",)),
        )(y, ssum, ssq, affine, slope)

    out = out_t[:, :M].reshape(C_out, N, od, oh, ow).transpose(1, 0, 2, 3, 4)
    return out


def spatial_concrete_dropout_forward(x, p_logit, conv_w, conv_b, bn_gamma,
                                     bn_beta, prelu_a, noise_key,
                                     weight_regularizer=1e-6,
                                     dropout_regularizer=1e-5):
    """SpatialConcreteDropout.forward(x, layer) with layer = Conv3d_Block."""
    N = x.shape[0]
    p = jax.nn.sigmoid(p_logit)                                    # (1,)

    # --- spatial concrete dropout: one relaxed-Bernoulli gate per sample ---
    u = jax.random.uniform(noise_key, (N,), dtype=jnp.float32)     # torch.rand((N,1,1,1,1))
    drop_logit = (jnp.log(p + CD_EPS) - jnp.log(1.0 - p + CD_EPS)
                  + jnp.log(u + CD_EPS) - jnp.log(1.0 - u + CD_EPS))
    drop_prob = jax.nn.sigmoid(drop_logit / CD_TEMP)
    gate_n = (1.0 - drop_prob) / (1.0 - p)                         # (N,)

    # --- layer(dropped x): dropout gate fused into the Pallas conv kernels ---
    out = conv3d_block_gated(x.astype(jnp.float32), gate_n, conv_w,
                             bn_gamma, bn_beta, prelu_a)

    # --- regularization term (scalar glue, plain JAX) ---
    sum_of_square = (jnp.sum(conv_w.astype(jnp.float32) ** 2)
                     + jnp.sum(conv_b.astype(jnp.float32) ** 2)
                     + jnp.sum(bn_gamma.astype(jnp.float32) ** 2)
                     + jnp.sum(bn_beta.astype(jnp.float32) ** 2)
                     + jnp.sum(jnp.asarray(prelu_a, jnp.float32) ** 2))
    weights_reg = weight_regularizer * sum_of_square / (1.0 - p)
    input_dim = x.shape[1] * x.shape[2] * x.shape[3] * x.shape[4]   # x[0].numel()
    dropout_reg = (p * jnp.log(p) + (1.0 - p) * jnp.log(1.0 - p))
    dropout_reg = dropout_reg * dropout_regularizer * input_dim
    regularization = weights_reg + dropout_reg
    return out, regularization


# ---------------------------------------------------------------------------
# Pure-JAX reference (same math as the PyTorch module; see comments for the
# exact algebraic equivalences used by the fused kernel).
# ---------------------------------------------------------------------------
def _reference_forward(x, p_logit, conv_w, conv_b, bn_gamma, bn_beta, prelu_a,
                       u, weight_regularizer=1e-6, dropout_regularizer=1e-5):
    p = jax.nn.sigmoid(p_logit)
    drop_prob = jax.nn.sigmoid((jnp.log(p + CD_EPS) - jnp.log(1.0 - p + CD_EPS)
                                + jnp.log(u + CD_EPS) - jnp.log(1.0 - u + CD_EPS))
                               / CD_TEMP)
    gate = (1.0 - drop_prob) / (1.0 - p)                           # (N,)

    # Conv3d(gate*x) + b == gate * Conv3d_nobias(x) + b  (gate constant per sample).
    # Written this way so the bf16 operand rounding matches the kernel exactly.
    y = lax.conv_general_dilated(
        x.astype(jnp.bfloat16).astype(jnp.float32),
        conv_w.astype(jnp.bfloat16).astype(jnp.float32),
        window_strides=(1, 1, 1), padding="VALID",
        dimension_numbers=("NCDHW", "OIDHW", "NCDHW"),
        precision=lax.Precision.HIGHEST)
    y = y * gate.reshape(-1, 1, 1, 1, 1) + conv_b.reshape(1, -1, 1, 1, 1)
    mean = jnp.mean(y, axis=(0, 2, 3, 4), keepdims=True)
    var = jnp.mean((y - mean) ** 2, axis=(0, 2, 3, 4), keepdims=True)
    yh = (y - mean) * lax.rsqrt(var + BN_EPS)
    yh = yh * bn_gamma.reshape(1, -1, 1, 1, 1) + bn_beta.reshape(1, -1, 1, 1, 1)
    out = jnp.where(yh > 0, yh, prelu_a * yh)

    sum_of_square = (jnp.sum(conv_w ** 2) + jnp.sum(conv_b ** 2)
                     + jnp.sum(bn_gamma ** 2) + jnp.sum(bn_beta ** 2)
                     + jnp.sum(jnp.asarray(prelu_a) ** 2))
    weights_reg = weight_regularizer * sum_of_square / (1.0 - p)
    input_dim = x[0].size
    dropout_reg = (p * jnp.log(p) + (1.0 - p) * jnp.log(1.0 - p))
    dropout_reg = dropout_reg * dropout_regularizer * input_dim
    return out, weights_reg + dropout_reg


def _run_case(key, N, C_in, C_out, S, K):
    kx, kw, kb, kg, kbe, knoise = jax.random.split(key, 6)
    x = jax.random.normal(kx, (N, C_in, S, S, S), dtype=jnp.float32)

    fan_in = C_in * K * K * K
    bound = 1.0 / np.sqrt(fan_in)
    conv_w = jax.random.uniform(kw, (C_out, C_in, K, K, K), jnp.float32, -bound, bound)
    conv_b = jax.random.uniform(kb, (C_out,), jnp.float32, -bound, bound)
    bn_gamma = 1.0 + 0.1 * jax.random.normal(kg, (C_out,), jnp.float32)
    bn_beta = 0.1 * jax.random.normal(kbe, (C_out,), jnp.float32)
    prelu_a = jnp.float32(0.25)                   # PReLU default slope

    # p_logit init: uniform(logit(0.2), logit(0.2)) == logit(0.2) exactly
    p_logit = jnp.full((1,), np.log(0.2) - np.log(1.0 - 0.2), jnp.float32)

    out, reg = spatial_concrete_dropout_forward(
        x, p_logit, conv_w, conv_b, bn_gamma, bn_beta, prelu_a, knoise)
    out = jax.block_until_ready(out)
    reg = jax.block_until_ready(reg)

    # reference uses the same per-sample uniform noise
    u = jax.random.uniform(knoise, (N,), dtype=jnp.float32)
    ref_out, ref_reg = _reference_forward(
        x, p_logit, conv_w, conv_b, bn_gamma, bn_beta, prelu_a, u)
    ref_out = jax.block_until_ready(ref_out)

    assert out.shape == (N, C_out, S - K + 1, S - K + 1, S - K + 1), out.shape
    np.testing.assert_allclose(np.asarray(out), np.asarray(ref_out),
                               rtol=1e-3, atol=1e-3)
    np.testing.assert_allclose(np.asarray(reg), np.asarray(ref_reg),
                               rtol=1e-5, atol=1e-7)


if __name__ == "__main__":
    # SpatialConcreteDropout wrapping Conv3d_Block(in=4, out=8, k=5)
    key = jax.random.PRNGKey(0)
    k1, k2 = jax.random.split(key)
    # small case (exercises the fused single-tile path): M = 2 * 4^3 = 128
    _run_case(k1, N=2, C_in=4, C_out=8, S=8, K=5)
    # larger case (exercises the tiled two-pass BN path): M = 2 * 8^3 = 1024
    _run_case(k2, N=2, C_in=4, C_out=8, S=12, K=5)

    print("KERNEL_OK")
</pallas_src>

<mosaic_0001>
module attributes {stable_mosaic.version = 11 : i64} {
  func.func @_fused_conv_bn_prelu_kernel(%arg0: i32, %arg1: memref<8x512xbf16, #tpu.memory_space<vmem>>, %arg2: memref<512x128xbf16, #tpu.memory_space<vmem>>, %arg3: memref<1x128xf32, #tpu.memory_space<vmem>>, %arg4: memref<8x2xf32, #tpu.memory_space<vmem>>, %arg5: memref<1xf32, #tpu.memory_space<smem>>, %arg6: memref<8x128xf32, #tpu.memory_space<vmem>>) attributes {dimension_semantics = [#tpu.dimension_semantics<arbitrary>], iteration_bounds = array<i64: 1>, scalar_prefetch = 0 : i64, scratch_operands = 0 : i64, tpu.core_type = #tpu.core_type<tc>, window_params = [{pipeline_mode = #tpu.pipeline_mode<synchronous>, transform_indices = @transform_0, window_bounds = array<i64: 8, 512>}, {pipeline_mode = #tpu.pipeline_mode<synchronous>, transform_indices = @transform_1, window_bounds = array<i64: 512, 128>}, {pipeline_mode = #tpu.pipeline_mode<synchronous>, transform_indices = @transform_2, window_bounds = array<i64: 1, 128>}, {pipeline_mode = #tpu.pipeline_mode<synchronous>, transform_indices = @transform_3, window_bounds = array<i64: 8, 2>}, {transform_indices = @transform_4, window_bounds = array<i64: 1>}, {pipeline_mode = #tpu.pipeline_mode<synchronous>, transform_indices = @transform_5, window_bounds = array<i64: 8, 128>}]} {
    %c0 = arith.constant 0 : index
    %c0_0 = arith.constant 0 : index
    %0 = vector.load %arg1[%c0, %c0_0] : memref<8x512xbf16, #tpu.memory_space<vmem>>, vector<8x512xbf16>
    %c0_1 = arith.constant 0 : index
    %c0_2 = arith.constant 0 : index
    %1 = vector.load %arg2[%c0_1, %c0_2] : memref<512x128xbf16, #tpu.memory_space<vmem>>, vector<512x128xbf16>
    %cst = arith.constant dense<0.000000e+00> : vector<8x128xf32>
    %2 = tpu.matmul %0, %1, %cst {dimension_numbers = #tpu.dot_dimension_numbers<[1], [0], [0], [1], [0, 0, 1, 1], [], []>} : vector<8x512xbf16>, vector<512x128xbf16>, vector<8x128xf32> -> vector<8x128xf32>
    %c0_3 = arith.constant 0 : index
    %c0_4 = arith.constant 0 : index
    %3 = vector.load %arg3[%c0_3, %c0_4] : memref<1x128xf32, #tpu.memory_space<vmem>>, vector<1x128xf32>
    %4 = vector.broadcast %3 : vector<1x128xf32> to vector<8x128xf32>
    %5 = arith.mulf %2, %4 : vector<8x128xf32>
    %cst_5 = arith.constant dense<0.000000e+00> : vector<8xf32>
    %6 = vector.multi_reduction <add>, %5, %cst_5 [1] : vector<8x128xf32> to vector<8xf32>
    %7 = vector.shape_cast %6 : vector<8xf32> to vector<8x1xf32>
    %8 = arith.mulf %5, %5 : vector<8x128xf32>
    %cst_6 = arith.constant dense<0.000000e+00> : vector<8xf32>
    %9 = vector.multi_reduction <add>, %8, %cst_6 [1] : vector<8x128xf32> to vector<8xf32>
    %10 = vector.shape_cast %9 : vector<8xf32> to vector<8x1xf32>
    %cst_7 = arith.constant 7.812500e-03 : f32
    %11 = vector.broadcast %cst_7 : f32 to vector<8x1xf32>
    %12 = arith.mulf %7, %11 : vector<8x1xf32>
    %cst_8 = arith.constant 7.812500e-03 : f32
    %13 = vector.broadcast %cst_8 : f32 to vector<8x1xf32>
    %14 = arith.mulf %10, %13 : vector<8x1xf32>
    %15 = arith.mulf %12, %12 : vector<8x1xf32>
    %16 = arith.subf %14, %15 : vector<8x1xf32>
    %cst_9 = arith.constant 9.99999974E-6 : f32
    %17 = vector.broadcast %cst_9 : f32 to vector<8x1xf32>
    %18 = arith.addf %16, %17 : vector<8x1xf32>
    %19 = math.rsqrt %18 : vector<8x1xf32>
    %c0_10 = arith.constant 0 : index
    %c0_11 = arith.constant 0 : index
    %20 = vector.load %arg4[%c0_10, %c0_11] : memref<8x2xf32, #tpu.memory_space<vmem>>, vector<8x2xf32>
    %21 = vector.extract_strided_slice %20 {offsets = [0, 0], sizes = [8, 1], strides = [1, 1]} : vector<8x2xf32> to vector<8x1xf32>
    %22 = vector.extract_strided_slice %20 {offsets = [0, 1], sizes = [8, 1], strides = [1, 1]} : vector<8x2xf32> to vector<8x1xf32>
    %23 = vector.broadcast %12 : vector<8x1xf32> to vector<8x128xf32>
    %24 = arith.subf %5, %23 : vector<8x128xf32>
    %25 = arith.mulf %19, %21 : vector<8x1xf32>
    %26 = vector.broadcast %25 : vector<8x1xf32> to vector<8x128xf32>
    %27 = arith.mulf %24, %26 : vector<8x128xf32>
    %28 = vector.broadcast %22 : vector<8x1xf32> to vector<8x128xf32>
    %29 = arith.addf %27, %28 : vector<8x128xf32>
    %c0_12 = arith.constant 0 : index
    %30 = memref.load %arg5[%c0_12] : memref<1xf32, #tpu.memory_space<smem>>
    %cst_13 = arith.constant 0.000000e+00 : f32
    %31 = vector.broadcast %cst_13 : f32 to vector<8x128xf32>
    %32 = arith.cmpf ogt, %29, %31 : vector<8x128xf32>
    %33 = vector.broadcast %30 : f32 to vector<8x128xf32>
    %34 = arith.mulf %33, %29 : vector<8x128xf32>
    %35 = arith.select %32, %29, %34 : vector<8x128xi1>, vector<8x128xf32>
    %c0_14 = arith.constant 0 : index
    %c0_15 = arith.constant 0 : index
    %36 = vector.load %arg6[%c0_14, %c0_15] : memref<8x128xf32, #tpu.memory_space<vmem>>, vector<8x128xf32>
    tpu.vector_store %arg6[%c0_14, %c0_15], %35 {strides = array<i32>} : memref<8x128xf32, #tpu.memory_space<vmem>>, vector<8x128xf32>,
    return
  }
  func.func @transform_0(%arg0: i32) -> (i32, i32) {
    %c0_i32 = arith.constant 0 : i32
    %c0_i32_0 = arith.constant 0 : i32
    %c0_i32_1 = arith.constant 0 : i32
    return %c0_i32, %c0_i32_0 : i32, i32
  }
  func.func @transform_1(%arg0: i32) -> (i32, i32) {
    %c0_i32 = arith.constant 0 : i32
    %c0_i32_0 = arith.constant 0 : i32
    %c0_i32_1 = arith.constant 0 : i32
    return %c0_i32, %c0_i32_0 : i32, i32
  }
  func.func @transform_2(%arg0: i32) -> (i32, i32) {
    %c0_i32 = arith.constant 0 : i32
    %c0_i32_0 = arith.constant 0 : i32
    %c0_i32_1 = arith.constant 0 : i32
    return %c0_i32, %c0_i32_0 : i32, i32
  }
  func.func @transform_3(%arg0: i32) -> (i32, i32) {
    %c0_i32 = arith.constant 0 : i32
    %c0_i32_0 = arith.constant 0 : i32
    %c0_i32_1 = arith.constant 0 : i32
    return %c0_i32, %c0_i32_0 : i32, i32
  }
  func.func @transform_4(%arg0: i32) -> i32 {
    %c0_i32 = arith.constant 0 : i32
    %c0_i32_0 = arith.constant 0 : i32
    return %c0_i32 : i32
  }
  func.func @transform_5(%arg0: i32) -> (i32, i32) {
    %c0_i32 = arith.constant 0 : i32
    %c0_i32_0 = arith.constant 0 : i32
    %c0_i32_1 = arith.constant 0 : i32
    return %c0_i32, %c0_i32_0 : i32, i32
  }
}

</mosaic_0001>

<llo_original>
// kernel: tpu_custom_call.1
$region0: #{tpu_custom_call.1}
  #allocation0 [shape = 'u32[]', space=smem, size = 0x4, offset = 0x4, fixed_abs, tag = 'smem constant byte address 0x4 - core index']
  #allocation1 [shape = 'u32[144,128]{1,0:T(1,128)}', space=vmem, size = 0x12000, scoped, tag = 'internal scratch']
  #allocation2 [shape = 'f32[1]{0:T(128)S(6)}', space=smem, size = 0x200, scoped, tag = 'scoped memory for tpu_custom_call.1']
  %s0 = inlined_call_operand.hbm [shape: bf16[8,512], index: 0, kind: input, shape index: {}]
  %s1 = inlined_call_operand.hbm [shape: bf16[512,128], index: 1, kind: input, shape index: {}]
  %s2 = inlined_call_operand.vmem [shape: f32[1,128], index: 2, kind: input, shape index: {}]
  %s3 = inlined_call_operand.vmem [shape: f32[8,2], index: 3, kind: input, shape index: {}]
  %s4 = inlined_call_operand.<no memory space> [shape: f32[1], index: 4, kind: input, shape index: {}]
  %s5 = inlined_call_operand.hbm [shape: f32[8,128], index: 5, kind: output, shape index: {}]
  %s6 = sld [smem:[#allocation0]]
  $region38: #{tpu_custom_call.1} parent=0
    _
  %s8 = ssub.s32 1, %s6
  %s9 = scalar_select 0, %s8, %s6
  %10 = sst [smem:[#allocation2]] %s4
  $region1: #{tpu_custom_call.1} parent=0
    #allocation3 [shape = 'u8[8192]{0}', space=vmem, size = 0x2000, scoped, tag = 'input window, operand 0, single buffered']
    #allocation4 [shape = 's32[1]{0}', space=sflag, size = 0x4, scoped, tag = 'scoped memory for tpu_custom_call.1']
    #allocation5 [shape = 's32[1]{0}', space=sflag, size = 0x4, scoped, tag = 'scoped memory for tpu_custom_call.1']
    #allocation6 [shape = 'u8[131072]{0}', space=vmem, size = 0x20000, scoped, tag = 'input window, operand 1, single buffered']
    #allocation7 [shape = 's32[1]{0}', space=sflag, size = 0x4, scoped, tag = 'scoped memory for tpu_custom_call.1']
    #allocation8 [shape = 'u8[4096]{0}', space=vmem, size = 0x1000, scoped, tag = 'output window, operand 0, single buffered']
    %11 = vsyncpa [#allocation4], 0
    %12 = vsyncpa [#allocation7], 0
    %13 = vsyncpa [#allocation5], 0
    // Predicated region
    $region2: #{tpu_custom_call.1} parent=1 // pred_check
      _
    $region3: #{tpu_custom_call.1} parent=1 // pred_check_branch
      %15 = sbr.rel (0) target = $region5
    $region4: #{tpu_custom_call.1} parent=1 // pred_region
      %s17 = ssub.s32 256, 256
      %18 = vsyncadd [#allocation4], %s17
      %s20 = sshll.u32 [#allocation3], 4
      %s21 = int_to_ptr.vmem [resolvable:$true] %s20
      %23 = dma.hbm_to_vmem [thread:$0]  %s0, 256, %s21, [#allocation4]
    $region5: #{tpu_custom_call.1} parent=1 // pred_fallthru
      _
    // Predicated region
    $region6: #{tpu_custom_call.1} parent=1 // pred_check
      _
    $region7: #{tpu_custom_call.1} parent=1 // pred_check_branch
      %25 = sbr.rel (0) target = $region9
    $region8: #{tpu_custom_call.1} parent=1 // pred_region
      %s27 = ssub.s32 4096, 4096
      %28 = vsyncadd [#allocation7], %s27
      %s29 = sshll.u32 [#allocation6], 4
      %s30 = int_to_ptr.vmem [resolvable:$true] %s29
      %35 = dma.hbm_to_vmem [thread:$0]  %s1, 4096, %s30, [#allocation7], 64, 64, 4
    $region9: #{tpu_custom_call.1} parent=1 // pred_fallthru
      _
    // Predicated region
    $region10: #{tpu_custom_call.1} parent=1 // pred_check
      _
    $region11: #{tpu_custom_call.1} parent=1 // pred_check_branch
      %37 = sbr.rel (0) target = $region13
    $region12: #{tpu_custom_call.1} parent=1 // pred_region
      _
    $region13: #{tpu_custom_call.1} parent=1 // pred_fallthru
      _
    // Predicated region
    $region14: #{tpu_custom_call.1} parent=1 // pred_check
      _
    $region15: #{tpu_custom_call.1} parent=1 // pred_check_branch
      %39 = sbr.rel (0) target = $region17
    $region16: #{tpu_custom_call.1} parent=1 // pred_region
      _
    $region17: #{tpu_custom_call.1} parent=1 // pred_fallthru
      _
    // Predicated region
    $region18: #{tpu_custom_call.1} parent=1 // pred_check
      _
    $region19: #{tpu_custom_call.1} parent=1 // pred_check_branch
      %41 = sbr.rel (0) target = $region21
    $region20: #{tpu_custom_call.1} parent=1 // pred_region
      _
    $region21: #{tpu_custom_call.1} parent=1 // pred_fallthru
      _
    // Predicated region
    $region22: #{tpu_custom_call.1} parent=1 // pred_check
      _
    $region23: #{tpu_custom_call.1} parent=1 // pred_check_branch
      %43 = sbr.rel (0) target = $region25
    $region24: #{tpu_custom_call.1} parent=1 // pred_region
      %44 = dma.done [#allocation4], 256
    $region25: #{tpu_custom_call.1} parent=1 // pred_fallthru
      _
    // Predicated region
    $region26: #{tpu_custom_call.1} parent=1 // pred_check
      _
    $region27: #{tpu_custom_call.1} parent=1 // pred_check_branch
      %46 = sbr.rel (0) target = $region29
    $region28: #{tpu_custom_call.1} parent=1 // pred_region
      %47 = dma.done [#allocation7], 4096
    $region29: #{tpu_custom_call.1} parent=1 // pred_fallthru
      _
    %v49 = vld [vmem:[#allocation3] sm:$0xff]
    %v50 = vld [vmem:[#allocation3 + $0x8] sm:$0xff]
    %v51 = vld [vmem:[#allocation6] sm:$0xf]
    %v52 = vld [vmem:[#allocation6 + $0x4] sm:$0xf]
    %v53 = vld [vmem:[#allocation6 + $0x8] sm:$0xf]
    %v54 = vld [vmem:[#allocation6 + $0xc] sm:$0xf]
    %v55 = vld [vmem:[#allocation6 + $0x10] sm:$0xf]
    %v56 = vld [vmem:[#allocation6 + $0x14] sm:$0xf]
    %v57 = vld [vmem:[#allocation6 + $0x18] sm:$0xf]
    %v58 = vld [vmem:[#allocation6 + $0x1c] sm:$0xf]
    %v59 = vld [vmem:[#allocation6 + $0x20] sm:$0xf]
    %v60 = vld [vmem:[#allocation6 + $0x24] sm:$0xf]
    %v61 = vld [vmem:[#allocation6 + $0x28] sm:$0xf]
    %v62 = vld [vmem:[#allocation6 + $0x2c] sm:$0xf]
    %v63 = vld [vmem:[#allocation6 + $0x30] sm:$0xf]
    %v64 = vld [vmem:[#allocation6 + $0x34] sm:$0xf]
    %v65 = vld [vmem:[#allocation6 + $0x38] sm:$0xf]
    %v66 = vld [vmem:[#allocation6 + $0x3c] sm:$0xf]
    %v67 = vld [vmem:[#allocation6 + $0x40] sm:$0xf]
    %v68 = vld [vmem:[#allocation6 + $0x44] sm:$0xf]
    %v69 = vld [vmem:[#allocation6 + $0x48] sm:$0xf]
    %v70 = vld [vmem:[#allocation6 + $0x4c] sm:$0xf]
    %v71 = vld [vmem:[#allocation6 + $0x50] sm:$0xf]
    %v72 = vld [vmem:[#allocation6 + $0x54] sm:$0xf]
    %v73 = vld [vmem:[#allocation6 + $0x58] sm:$0xf]
    %v74 = vld [vmem:[#allocation6 + $0x5c] sm:$0xf]
    %v75 = vld [vmem:[#allocation6 + $0x60] sm:$0xf]
    %v76 = vld [vmem:[#allocation6 + $0x64] sm:$0xf]
    %v77 = vld [vmem:[#allocation6 + $0x68] sm:$0xf]
    %v78 = vld [vmem:[#allocation6 + $0x6c] sm:$0xf]
    %v79 = vld [vmem:[#allocation6 + $0x70] sm:$0xf]
    %v80 = vld [vmem:[#allocation6 + $0x74] sm:$0xf]
    %v81 = vld [vmem:[#allocation6 + $0x78] sm:$0xf]
    %v82 = vld [vmem:[#allocation6 + $0x7c] sm:$0xf]
    %v83 = vld [vmem:[#allocation6 + $0x80] sm:$0xf]
    %v84 = vld [vmem:[#allocation6 + $0x84] sm:$0xf]
    %v85 = vld [vmem:[#allocation6 + $0x88] sm:$0xf]
    %v86 = vld [vmem:[#allocation6 + $0x8c] sm:$0xf]
    %v87 = vld [vmem:[#allocation6 + $0x90] sm:$0xf]
    %v88 = vld [vmem:[#allocation6 + $0x94] sm:$0xf]
    %v89 = vld [vmem:[#allocation6 + $0x98] sm:$0xf]
    %v90 = vld [vmem:[#allocation6 + $0x9c] sm:$0xf]
    %v91 = vld [vmem:[#allocation6 + $0xa0] sm:$0xf]
    %v92 = vld [vmem:[#allocation6 + $0xa4] sm:$0xf]
    %v93 = vld [vmem:[#allocation6 + $0xa8] sm:$0xf]
    %v94 = vld [vmem:[#allocation6 + $0xac] sm:$0xf]
    %v95 = vld [vmem:[#allocation6 + $0xb0] sm:$0xf]
    %v96 = vld [vmem:[#allocation6 + $0xb4] sm:$0xf]
    %v97 = vld [vmem:[#allocation6 + $0xb8] sm:$0xf]
    %v98 = vld [vmem:[#allocation6 + $0xbc] sm:$0xf]
    %v99 = vld [vmem:[#allocation6 + $0xc0] sm:$0xf]
    %v100 = vld [vmem:[#allocation6 + $0xc4] sm:$0xf]
    %v101 = vld [vmem:[#allocation6 + $0xc8] sm:$0xf]
    %v102 = vld [vmem:[#allocation6 + $0xcc] sm:$0xf]
    %v103 = vld [vmem:[#allocation6 + $0xd0] sm:$0xf]
    %v104 = vld [vmem:[#allocation6 + $0xd4] sm:$0xf]
    %v105 = vld [vmem:[#allocation6 + $0xd8] sm:$0xf]
    %v106 = vld [vmem:[#allocation6 + $0xdc] sm:$0xf]
    %v107 = vld [vmem:[#allocation6 + $0xe0] sm:$0xf]
    %v108 = vld [vmem:[#allocation6 + $0xe4] sm:$0xf]
    %v109 = vld [vmem:[#allocation6 + $0xe8] sm:$0xf]
    %v110 = vld [vmem:[#allocation6 + $0xec] sm:$0xf]
    %v111 = vld [vmem:[#allocation6 + $0xf0] sm:$0xf]
    %v112 = vld [vmem:[#allocation6 + $0xf4] sm:$0xf]
    %v113 = vld [vmem:[#allocation6 + $0xf8] sm:$0xf]
    %v114 = vld [vmem:[#allocation6 + $0xfc] sm:$0xf]
    %v117 = vunpack.c.l.b16 %v49
    %v118 = vunpack.c.h.b16 %v49
    %v119 = vunpack.c.l.b16 %v50
    %v120 = vunpack.c.h.b16 %v50
    %v121 = vpack.c.b16 %v117, %v117
    %v122 = vpack.c.b16 %v118, %v118
    %v123 = vpack.c.b16 %v119, %v119
    %v124 = vpack.c.b16 %v120, %v120
    %v193 = vunpack.c.l.b16 %v51
    %v194 = vunpack.c.l.b16 %v52
    %v195 = vunpack.c.l.b16 %v53
    %v196 = vunpack.c.l.b16 %v54
    %v197 = vunpack.c.l.b16 %v55
    %v198 = vunpack.c.l.b16 %v56
    %v199 = vunpack.c.l.b16 %v57
    %v200 = vunpack.c.l.b16 %v58
    %v201 = vunpack.c.l.b16 %v59
    %v202 = vunpack.c.l.b16 %v60
    %v203 = vunpack.c.l.b16 %v61
    %v204 = vunpack.c.l.b16 %v62
    %v205 = vunpack.c.l.b16 %v63
    %v206 = vunpack.c.l.b16 %v64
    %v207 = vunpack.c.l.b16 %v65
    %v208 = vunpack.c.l.b16 %v66
    %v209 = vunpack.c.l.b16 %v67
    %v210 = vunpack.c.l.b16 %v68
    %v211 = vunpack.c.l.b16 %v69
    %v212 = vunpack.c.l.b16 %v70
    %v213 = vunpack.c.l.b16 %v71
    %v214 = vunpack.c.l.b16 %v72
    %v215 = vunpack.c.l.b16 %v73
    %v216 = vunpack.c.l.b16 %v74
    %v217 = vunpack.c.l.b16 %v75
    %v218 = vunpack.c.l.b16 %v76
    %v219 = vunpack.c.l.b16 %v77
    %v220 = vunpack.c.l.b16 %v78
    %v221 = vunpack.c.l.b16 %v79
    %v222 = vunpack.c.l.b16 %v80
    %v223 = vunpack.c.l.b16 %v81
    %v224 = vunpack.c.l.b16 %v82
    %v225 = vunpack.c.l.b16 %v83
    %v226 = vunpack.c.l.b16 %v84
    %v227 = vunpack.c.l.b16 %v85
    %v228 = vunpack.c.l.b16 %v86
    %v229 = vunpack.c.l.b16 %v87
    %v230 = vunpack.c.l.b16 %v88
    %v231 = vunpack.c.l.b16 %v89
    %v232 = vunpack.c.l.b16 %v90
    %v233 = vunpack.c.l.b16 %v91
    %v234 = vunpack.c.l.b16 %v92
    %v235 = vunpack.c.l.b16 %v93
    %v236 = vunpack.c.l.b16 %v94
    %v237 = vunpack.c.l.b16 %v95
    %v238 = vunpack.c.l.b16 %v96
    %v239 = vunpack.c.l.b16 %v97
    %v240 = vunpack.c.l.b16 %v98
    %v241 = vunpack.c.l.b16 %v99
    %v242 = vunpack.c.l.b16 %v100
    %v243 = vunpack.c.l.b16 %v101
    %v244 = vunpack.c.l.b16 %v102
    %v245 = vunpack.c.l.b16 %v103
    %v246 = vunpack.c.l.b16 %v104
    %v247 = vunpack.c.l.b16 %v105
    %v248 = vunpack.c.l.b16 %v106
    %v249 = vunpack.c.l.b16 %v107
    %v250 = vunpack.c.l.b16 %v108
    %v251 = vunpack.c.l.b16 %v109
    %v252 = vunpack.c.l.b16 %v110
    %v253 = vunpack.c.l.b16 %v111
    %v254 = vunpack.c.l.b16 %v112
    %v255 = vunpack.c.l.b16 %v113
    %v256 = vunpack.c.l.b16 %v114
    %v257 = vpack.c.b16 %v194, %v193
    %v258 = vpack.c.b16 %v196, %v195
    %v259 = vpack.c.b16 %v198, %v197
    %v260 = vpack.c.b16 %v200, %v199
    %v261 = vpack.c.b16 %v202, %v201
    %v262 = vpack.c.b16 %v204, %v203
    %v263 = vpack.c.b16 %v206, %v205
    %v264 = vpack.c.b16 %v208, %v207
    %v265 = vpack.c.b16 %v210, %v209
    %v266 = vpack.c.b16 %v212, %v211
    %v267 = vpack.c.b16 %v214, %v213
    %v268 = vpack.c.b16 %v216, %v215
    %v269 = vpack.c.b16 %v218, %v217
    %v270 = vpack.c.b16 %v220, %v219
    %v271 = vpack.c.b16 %v222, %v221
    %v272 = vpack.c.b16 %v224, %v223
    %v273 = vpack.c.b16 %v226, %v225
    %v274 = vpack.c.b16 %v228, %v227
    %v275 = vpack.c.b16 %v230, %v229
    %v276 = vpack.c.b16 %v232, %v231
    %v277 = vpack.c.b16 %v234, %v233
    %v278 = vpack.c.b16 %v236, %v235
    %v279 = vpack.c.b16 %v238, %v237
    %v280 = vpack.c.b16 %v240, %v239
    %v281 = vpack.c.b16 %v242, %v241
    %v282 = vpack.c.b16 %v244, %v243
    %v283 = vpack.c.b16 %v246, %v245
    %v284 = vpack.c.b16 %v248, %v247
    %v285 = vpack.c.b16 %v250, %v249
    %v286 = vpack.c.b16 %v252, %v251
    %v287 = vpack.c.b16 %v254, %v253
    %v288 = vpack.c.b16 %v256, %v255
    %321 = vmatprep.subr.bf16.mxu0 0
    %322 = vmatpush1.bf16.msra.mxu0 %v257
    %323 = vmatprep.subr.bf16.mxu0 0
    %324 = vmatpush1.bf16.msra.mxu0 %v258
    %325 = vmatprep.subr.bf16.mxu0 0
    %326 = vmatpush1.bf16.msra.mxu0 %v259
    %327 = vmatprep.subr.bf16.mxu0 0
    %328 = vmatpush1.bf16.msra.mxu0 %v260
    %329 = vmatprep.subr.bf16.mxu0 0
    %330 = vmatpush1.bf16.msra.mxu0 %v261
    %331 = vmatprep.subr.bf16.mxu0 0
    %332 = vmatpush1.bf16.msra.mxu0 %v262
    %333 = vmatprep.subr.bf16.mxu0 0
    %334 = vmatpush1.bf16.msra.mxu0 %v263
    %335 = vmatprep.subr.bf16.mxu0 0
    %336 = vmatpush1.bf16.msra.mxu0 %v264
    %337 = vmatprep.subr.bf16.mxu0 0
    %338 = vmatpush1.bf16.msra.mxu0 %v265
    %339 = vmatprep.subr.bf16.mxu0 0
    %340 = vmatpush1.bf16.msra.mxu0 %v266
    %341 = vmatprep.subr.bf16.mxu0 0
    %342 = vmatpush1.bf16.msra.mxu0 %v267
    %343 = vmatprep.subr.bf16.mxu0 0
    %344 = vmatpush1.bf16.msra.mxu0 %v268
    %345 = vmatprep.subr.bf16.mxu0 0
    %346 = vmatpush1.bf16.msra.mxu0 %v269
    %347 = vmatprep.subr.bf16.mxu0 0
    %348 = vmatpush1.bf16.msra.mxu0 %v270
    %349 = vmatprep.subr.bf16.mxu0 0
    %350 = vmatpush1.bf16.msra.mxu0 %v271
    %351 = vmatprep.subr.bf16.mxu0 0
    %352 = vmatpush1.bf16.msra.mxu0 %v272
    %353 = vmatprep.mubr.bf16.mxu0 %v122
    %354 = vmatmul.mubr.bf16.gmra.mrb[0].mxu0 %v121
    %v355 = vpop.f32.mrb[0].mxu0
    %v356 = vadd.f32 0.0, %v355
    %v357 = vpop.f32.mrb[0].mxu0
    %v358 = vpop.f32.mrb[0].mxu0
    %v359 = vpop.f32.mrb[0].mxu0
    %360 = vdwg.mxu0
    %361 = vmatprep.subr.bf16.mxu0 0
    %362 = vmatpush1.bf16.msra.mxu0 %v273
    %363 = vmatprep.subr.bf16.mxu0 0
    %364 = vmatpush1.bf16.msra.mxu0 %v274
    %365 = vmatprep.subr.bf16.mxu0 0
    %366 = vmatpush1.bf16.msra.mxu0 %v275
    %367 = vmatprep.subr.bf16.mxu0 0
    %368 = vmatpush1.bf16.msra.mxu0 %v276
    %369 = vmatprep.subr.bf16.mxu0 0
    %370 = vmatpush1.bf16.msra.mxu0 %v277
    %371 = vmatprep.subr.bf16.mxu0 0
    %372 = vmatpush1.bf16.msra.mxu0 %v278
    %373 = vmatprep.subr.bf16.mxu0 0
    %374 = vmatpush1.bf16.msra.mxu0 %v279
    %375 = vmatprep.subr.bf16.mxu0 0
    %376 = vmatpush1.bf16.msra.mxu0 %v280
    %377 = vmatprep.subr.bf16.mxu0 0
    %378 = vmatpush1.bf16.msra.mxu0 %v281
    %379 = vmatprep.subr.bf16.mxu0 0
    %380 = vmatpush1.bf16.msra.mxu0 %v282
    %381 = vmatprep.subr.bf16.mxu0 0
    %382 = vmatpush1.bf16.msra.mxu0 %v283
    %383 = vmatprep.subr.bf16.mxu0 0
    %384 = vmatpush1.bf16.msra.mxu0 %v284
    %385 = vmatprep.subr.bf16.mxu0 0
    %386 = vmatpush1.bf16.msra.mxu0 %v285
    %387 = vmatprep.subr.bf16.mxu0 0
    %388 = vmatpush1.bf16.msra.mxu0 %v286
    %389 = vmatprep.subr.bf16.mxu0 0
    %390 = vmatpush1.bf16.msra.mxu0 %v287
    %391 = vmatprep.subr.bf16.mxu0 0
    %392 = vmatpush1.bf16.msra.mxu0 %v288
    %393 = vmatprep.mubr.bf16.mxu0 %v124
    %394 = vmatmul.mubr.bf16.gmra.mrb[0].mxu0 %v123
    %v395 = vpop.f32.mrb[0].mxu0
    %v396 = vadd.f32 %v356, %v395
    %v397 = vpop.f32.mrb[0].mxu0
    %v398 = vpop.f32.mrb[0].mxu0
    %v399 = vpop.f32.mrb[0].mxu0
    %400 = vdwg.mxu0
    %v401 = vld [vmem:[%s2] sm:$0x1]
    %v403 = vlaneseq
    %v404 = vshrl.u32 %v403, 7
    %v405 = vsub.s32 0, %v404
    %v406 = vrot.slane %v401, %v405
    %v408 = vmul.f32 %v396, %v406
    %409 = vadd.xlane.f32.xlu0 %v408
    %v410 = vpop.xlane.xlu0 %409
    %v411 = vmul.f32 %v408, %v408
    %412 = vadd.xlane.f32.xlu0 %v411
    %v413 = vpop.xlane.xlu0 %412
    %v414 = vmul.f32 %v410, 0.0078125
    %v415 = vmul.f32 %v413, 0.0078125
    %v416 = vmul.f32 %v414, %v414
    %v417 = vsub.f32 %v415, %v416
    %v418 = vadd.f32 %v417, 1e-05
    %v419 = vrsqrt.pop %v418
    %v420 = vld [vmem:[%s3] sm:$0xff]
    %v421 = vsub.f32 %v408, %v414
    %v422 = vmul.f32 %v419, %v420
    %424 = vset.pattern.permute.xlu0 0
    %425 = vperm.xlu0 %424, %v422
    %v426 = vpop.permute.xlu0 %425
    %v428 = vmul.f32 %v421, %v426
    %430 = vset.pattern.permute.xlu0 1
    %431 = vperm.xlu0 %430, %v420
    %v432 = vpop.permute.xlu0 %431
    %v434 = vadd.f32 %v428, %v432
    %s435 = sld [smem:[#allocation2]]
    %vm436 = vcmp.gt.f32.partialorder %v434, 0.0
    %v437 = vstv %s435
    %v438 = vmul.f32 %v437, %v434
    %v439 = vsel %vm436, %v434, %v438
    %440 = vst [vmem:[#allocation8] sm:$0xff] %v439
    // Predicated region
    $region30: #{tpu_custom_call.1} parent=1 // pred_check
      _
    $region31: #{tpu_custom_call.1} parent=1 // pred_check_branch
      %442 = sbr.rel (0) target = $region33
    $region32: #{tpu_custom_call.1} parent=1 // pred_region
      %s444 = ssub.s32 128, 128
      %445 = vsyncadd [#allocation5], %s444
      %s447 = sshll.u32 [#allocation8], 4
      %s448 = int_to_ptr.vmem [resolvable:$true] %s447
      %450 = dma.vmem_to_hbm [thread:$0]  %s448, 128, %s5, [#allocation5]
    $region33: #{tpu_custom_call.1} parent=1 // pred_fallthru
      _
    // Predicated region
    $region34: #{tpu_custom_call.1} parent=1 // pred_check
      _
    $region35: #{tpu_custom_call.1} parent=1 // pred_check_branch
      %452 = sbr.rel (0) target = $region37
    $region36: #{tpu_custom_call.1} parent=1 // pred_region
      %453 = dma.done [#allocation5], 128
    $region37: #{tpu_custom_call.1} parent=1 // pred_fallthru
      _
    %454 = vsyncpa [#allocation4], 1
    %455 = vsyncpa [#allocation7], 1
    %456 = vsyncpa [#allocation5], 1

</llo_original>
